<compile_context>
chip_gen: v5e
topology: v5e:2x2
jax: 0.10.0
libtpu: 0.0.40
codegen_flags: <defaults>
</compile_context>

<pallas_src>
import functools

import jax
import jax.numpy as jnp
from jax.experimental import pallas as pl
from jax.experimental.pallas import tpu as pltpu

_NEG_INF = -1e30  # bias for padded logit lanes -> exp() == 0 exactly in f32


def _cdiv(a, b):
    return (a + b - 1) // b


def _round_up(x, m):
    return _cdiv(x, m) * m


def _choose_tile(B, block_b, *, min_tiles=2):
    """Balanced, sublane-aligned batch tiles.

    - Minimizes padded rows when B is not a multiple of block_b
      (e.g. B=520, block_b=2048 -> tb=264, bp=528, not bp=2048).
    - Forces at least `min_tiles` grid steps (when B is big enough) so that
      dimension_semantics=("parallel",) can shard the batch over both v7x
      TensorCores.
    """
    n = _cdiv(B, block_b)
    if n < min_tiles and B >= min_tiles * 8:
        n = min_tiles
    tb = _round_up(_cdiv(B, n), 8)
    bp = _round_up(B, tb)
    return tb, bp


def _policy_kernel(x_ref, w1_ref, b1_ref, w2_ref, b2_ref, w3_ref, b3_ref, out_ref):
    # x tile: (TB, feature_dim) f32.  Weights arrive as bf16; biases f32.
    x = x_ref[...].astype(jnp.bfloat16)

    # Linear(feature_dim, 128) + ReLU  (MXU bf16 matmul, f32 accumulate)
    h1 = jnp.dot(x, w1_ref[...], preferred_element_type=jnp.float32) + b1_ref[...]
    h1 = jnp.maximum(h1, 0.0)

    # Linear(128, 64 -> padded 128) + ReLU (pad columns are zero -> ReLU(0)=0)
    h2 = jnp.dot(h1.astype(jnp.bfloat16), w2_ref[...],
                 preferred_element_type=jnp.float32) + b2_ref[...]
    h2 = jnp.maximum(h2, 0.0)

    # Linear(64 -> 128, action_dim -> padded 128); pad lanes get -1e30 bias
    logits = jnp.dot(h2.astype(jnp.bfloat16), w3_ref[...],
                     preferred_element_type=jnp.float32) + b3_ref[...]

    # Numerically stable softmax over the padded lane axis; padded lanes
    # contribute exp(-1e30 - m) == 0 to max and denominator.  Exact divide:
    # the kernel is HBM/overhead-bound so this costs nothing and guarantees
    # exactly-normalized rows for downstream Categorical sampling.
    m = jnp.max(logits, axis=-1, keepdims=True)
    e = jnp.exp(logits - m)
    denom = jnp.sum(e, axis=-1, keepdims=True)
    probs = e / denom

    # Compact store: only the real action columns go back to HBM.
    a = out_ref.shape[-1]
    out_ref[...] = probs[:, :a].astype(out_ref.dtype)


def prepare_params(params):
    """Pad / cast (in_dim,out_dim)-layout params into kernel operands.

    Called ONCE per parameter set / update, outside the per-step forward, so
    the padding and bf16 casts are not re-executed on every inference call.
    """
    w1, b1, w2, b2, w3, b3 = params
    h2 = w2.shape[1]
    action_dim = w3.shape[1]

    h2p = max(_round_up(h2, 128), 128)
    npad = max(_round_up(action_dim, 128), 128)

    w1k = w1.astype(jnp.bfloat16)
    b1k = b1.astype(jnp.float32)
    w2k = jnp.pad(w2, ((0, 0), (0, h2p - h2))).astype(jnp.bfloat16)
    b2k = jnp.pad(b2, ((0, 0), (0, h2p - h2))).astype(jnp.float32)
    w3k = jnp.pad(w3, ((0, h2p - h2), (0, npad - action_dim))).astype(jnp.bfloat16)
    b3k = jnp.pad(b3, ((0, 0), (0, npad - action_dim)),
                  constant_values=_NEG_INF).astype(jnp.float32)
    return (w1k, b1k, w2k, b2k, w3k, b3k)


@functools.partial(jax.jit, static_argnames=("action_dim", "block_b"))
def policy_network_forward(x, kernel_params, *, action_dim, block_b=2048):
    """x: (B, feature_dim) f32, kernel_params from prepare_params()
    -> (B, action_dim) probabilities (f32)."""
    w1k, b1k, w2k, b2k, w3k, b3k = kernel_params
    B, feature_dim = x.shape
    h1 = w1k.shape[1]       # 128
    h2p = w2k.shape[1]      # 128 (padded 64)
    npad = w3k.shape[1]     # 128 (padded action_dim)

    # --- batch tiling: weights resident, x/out tiles pipelined over the grid ---
    tb, bp = _choose_tile(B, block_b)
    if bp != B:
        x = jnp.pad(x, ((0, bp - B), (0, 0)))
    grid = (bp // tb,)

    out = pl.pallas_call(
        _policy_kernel,
        out_shape=jax.ShapeDtypeStruct((bp, action_dim), jnp.float32),
        grid=grid,
        in_specs=[
            pl.BlockSpec((tb, feature_dim), lambda i: (i, 0)),   # x: tiled on batch
            pl.BlockSpec((feature_dim, h1), lambda i: (0, 0)),   # weights/biases:
            pl.BlockSpec((1, h1), lambda i: (0, 0)),             #  constant index
            pl.BlockSpec((h1, h2p), lambda i: (0, 0)),           #  -> VMEM-resident
            pl.BlockSpec((1, h2p), lambda i: (0, 0)),            #  across grid steps
            pl.BlockSpec((h2p, npad), lambda i: (0, 0)),
            pl.BlockSpec((1, npad), lambda i: (0, 0)),
        ],
        # Compact output: last dim == full array dim (action_dim), so the
        # (8,128) divisibility rule does not apply.
        out_specs=pl.BlockSpec((tb, action_dim), lambda i: (i, 0)),
        compiler_params=pltpu.CompilerParams(
            dimension_semantics=("parallel",),   # megacore sharding on v7x
        ),
    )(x, w1k, b1k, w2k, b2k, w3k, b3k)

    # Row trim only (no full-array column slice pass anymore).
    return out[:B] if bp != B else out


def init_params(key, feature_dim, action_dim):
    """Deterministic init mirroring torch.nn.Linear default (uniform +/- 1/sqrt(fan_in)).
    Weights stored as (in_dim, out_dim) so the kernel computes x @ W + b."""
    def linear(k, fan_in, fan_out):
        kw, kb = jax.random.split(k)
        bound = 1.0 / jnp.sqrt(fan_in)
        w = jax.random.uniform(kw, (fan_in, fan_out), jnp.float32, -bound, bound)
        b = jax.random.uniform(kb, (1, fan_out), jnp.float32, -bound, bound)
        return w, b

    k1, k2, k3 = jax.random.split(key, 3)
    w1, b1 = linear(k1, feature_dim, 128)
    w2, b2 = linear(k2, 128, 64)
    w3, b3 = linear(k3, 64, action_dim)
    return (w1, b1, w2, b2, w3, b3)


if __name__ == "__main__":
    # NOTE: at batch=8 this is launch-overhead-bound; the tiling pays off once
    # many environment states are batched per call (B in the thousands).
    feature_dim = 16
    action_dim = 4
    batch = 8

    key = jax.random.PRNGKey(0)
    kx, kp = jax.random.split(key)
    x = jax.random.normal(kx, (batch, feature_dim), dtype=jnp.float32)
    params = init_params(kp, feature_dim, action_dim)

    # Pad/cast the weights ONCE (outside the per-step forward).
    kernel_params = prepare_params(params)

    probs = policy_network_forward(x, kernel_params, action_dim=action_dim)
    jax.block_until_ready(probs)

    # pure-JAX f32 reference
    w1, b1, w2, b2, w3, b3 = params
    r = jnp.maximum(x @ w1 + b1, 0.0)
    r = jnp.maximum(r @ w2 + b2, 0.0)
    ref = jax.nn.softmax(r @ w3 + b3, axis=-1)

    assert probs.shape == (batch, action_dim)
    # exact divide -> rows sum to 1 to f32 precision
    assert bool(jnp.allclose(jnp.sum(probs, axis=-1), 1.0, atol=1e-3))
    # bf16 MXU inputs vs f32 reference -> ~1e-2 relative error is expected
    assert bool(jnp.allclose(probs, ref, atol=5e-2))

    print("KERNEL_OK")
</pallas_src>

<mosaic_0001>
module attributes {stable_mosaic.version = 11 : i64} {
  func.func @_policy_kernel(%arg0: i32, %arg1: memref<8x16xf32, #tpu.memory_space<vmem>>, %arg2: memref<16x128xbf16, #tpu.memory_space<vmem>>, %arg3: memref<1x128xf32, #tpu.memory_space<vmem>>, %arg4: memref<128x128xbf16, #tpu.memory_space<vmem>>, %arg5: memref<1x128xf32, #tpu.memory_space<vmem>>, %arg6: memref<128x128xbf16, #tpu.memory_space<vmem>>, %arg7: memref<1x128xf32, #tpu.memory_space<vmem>>, %arg8: memref<8x4xf32, #tpu.memory_space<vmem>>) attributes {dimension_semantics = [#tpu.dimension_semantics<parallel>], iteration_bounds = array<i64: 1>, scalar_prefetch = 0 : i64, scratch_operands = 0 : i64, tpu.core_type = #tpu.core_type<tc>, window_params = [{transform_indices = @transform_0, window_bounds = array<i64: 8, 16>}, {pipeline_mode = #tpu.pipeline_mode<synchronous>, transform_indices = @transform_1, window_bounds = array<i64: 16, 128>}, {pipeline_mode = #tpu.pipeline_mode<synchronous>, transform_indices = @transform_2, window_bounds = array<i64: 1, 128>}, {pipeline_mode = #tpu.pipeline_mode<synchronous>, transform_indices = @transform_3, window_bounds = array<i64: 128, 128>}, {pipeline_mode = #tpu.pipeline_mode<synchronous>, transform_indices = @transform_4, window_bounds = array<i64: 1, 128>}, {pipeline_mode = #tpu.pipeline_mode<synchronous>, transform_indices = @transform_5, window_bounds = array<i64: 128, 128>}, {pipeline_mode = #tpu.pipeline_mode<synchronous>, transform_indices = @transform_6, window_bounds = array<i64: 1, 128>}, {transform_indices = @transform_7, window_bounds = array<i64: 8, 4>}]} {
    %c0 = arith.constant 0 : index
    %c0_0 = arith.constant 0 : index
    %0 = vector.load %arg1[%c0, %c0_0] : memref<8x16xf32, #tpu.memory_space<vmem>>, vector<8x16xf32>
    %1 = arith.truncf %0 : vector<8x16xf32> to vector<8x16xbf16>
    %c0_1 = arith.constant 0 : index
    %c0_2 = arith.constant 0 : index
    %2 = vector.load %arg2[%c0_1, %c0_2] : memref<16x128xbf16, #tpu.memory_space<vmem>>, vector<16x128xbf16>
    %cst = arith.constant dense<0.000000e+00> : vector<8x128xf32>
    %3 = tpu.matmul %1, %2, %cst {dimension_numbers = #tpu.dot_dimension_numbers<[1], [0], [0], [1], [0, 0, 1, 1], [], []>} : vector<8x16xbf16>, vector<16x128xbf16>, vector<8x128xf32> -> vector<8x128xf32>
    %c0_3 = arith.constant 0 : index
    %c0_4 = arith.constant 0 : index
    %4 = vector.load %arg3[%c0_3, %c0_4] : memref<1x128xf32, #tpu.memory_space<vmem>>, vector<1x128xf32>
    %5 = vector.broadcast %4 : vector<1x128xf32> to vector<8x128xf32>
    %6 = arith.addf %3, %5 : vector<8x128xf32>
    %cst_5 = arith.constant 0.000000e+00 : f32
    %7 = vector.broadcast %cst_5 : f32 to vector<8x128xf32>
    %8 = arith.maximumf %6, %7 : vector<8x128xf32>
    %9 = arith.truncf %8 : vector<8x128xf32> to vector<8x128xbf16>
    %c0_6 = arith.constant 0 : index
    %c0_7 = arith.constant 0 : index
    %10 = vector.load %arg4[%c0_6, %c0_7] : memref<128x128xbf16, #tpu.memory_space<vmem>>, vector<128x128xbf16>
    %cst_8 = arith.constant dense<0.000000e+00> : vector<8x128xf32>
    %11 = tpu.matmul %9, %10, %cst_8 {dimension_numbers = #tpu.dot_dimension_numbers<[1], [0], [0], [1], [0, 0, 1, 1], [], []>} : vector<8x128xbf16>, vector<128x128xbf16>, vector<8x128xf32> -> vector<8x128xf32>
    %c0_9 = arith.constant 0 : index
    %c0_10 = arith.constant 0 : index
    %12 = vector.load %arg5[%c0_9, %c0_10] : memref<1x128xf32, #tpu.memory_space<vmem>>, vector<1x128xf32>
    %13 = vector.broadcast %12 : vector<1x128xf32> to vector<8x128xf32>
    %14 = arith.addf %11, %13 : vector<8x128xf32>
    %cst_11 = arith.constant 0.000000e+00 : f32
    %15 = vector.broadcast %cst_11 : f32 to vector<8x128xf32>
    %16 = arith.maximumf %14, %15 : vector<8x128xf32>
    %17 = arith.truncf %16 : vector<8x128xf32> to vector<8x128xbf16>
    %c0_12 = arith.constant 0 : index
    %c0_13 = arith.constant 0 : index
    %18 = vector.load %arg6[%c0_12, %c0_13] : memref<128x128xbf16, #tpu.memory_space<vmem>>, vector<128x128xbf16>
    %cst_14 = arith.constant dense<0.000000e+00> : vector<8x128xf32>
    %19 = tpu.matmul %17, %18, %cst_14 {dimension_numbers = #tpu.dot_dimension_numbers<[1], [0], [0], [1], [0, 0, 1, 1], [], []>} : vector<8x128xbf16>, vector<128x128xbf16>, vector<8x128xf32> -> vector<8x128xf32>
    %c0_15 = arith.constant 0 : index
    %c0_16 = arith.constant 0 : index
    %20 = vector.load %arg7[%c0_15, %c0_16] : memref<1x128xf32, #tpu.memory_space<vmem>>, vector<1x128xf32>
    %21 = vector.broadcast %20 : vector<1x128xf32> to vector<8x128xf32>
    %22 = arith.addf %19, %21 : vector<8x128xf32>
    %cst_17 = arith.constant dense<0xFF800000> : vector<8xf32>
    %23 = vector.multi_reduction <maximumf>, %22, %cst_17 [1] : vector<8x128xf32> to vector<8xf32>
    %24 = vector.shape_cast %23 : vector<8xf32> to vector<8x1xf32>
    %25 = vector.broadcast %24 : vector<8x1xf32> to vector<8x128xf32>
    %26 = arith.subf %22, %25 : vector<8x128xf32>
    %27 = math.exp %26 : vector<8x128xf32>
    %cst_18 = arith.constant dense<0.000000e+00> : vector<8xf32>
    %28 = vector.multi_reduction <add>, %27, %cst_18 [1] : vector<8x128xf32> to vector<8xf32>
    %29 = vector.shape_cast %28 : vector<8xf32> to vector<8x1xf32>
    %30 = vector.broadcast %29 : vector<8x1xf32> to vector<8x128xf32>
    %31 = arith.divf %27, %30 : vector<8x128xf32>
    %32 = vector.extract_strided_slice %31 {offsets = [0, 0], sizes = [8, 4], strides = [1, 1]} : vector<8x128xf32> to vector<8x4xf32>
    %c0_19 = arith.constant 0 : index
    %c0_20 = arith.constant 0 : index
    %33 = vector.load %arg8[%c0_19, %c0_20] : memref<8x4xf32, #tpu.memory_space<vmem>>, vector<8x4xf32>
    tpu.vector_store %arg8[%c0_19, %c0_20], %32 {strides = array<i32>} : memref<8x4xf32, #tpu.memory_space<vmem>>, vector<8x4xf32>,
    return
  }
  func.func @transform_0(%arg0: i32) -> (i32, i32) {
    %c0_i32 = arith.constant 0 : i32
    %c0_i32_0 = arith.constant 0 : i32
    return %arg0, %c0_i32 : i32, i32
  }
  func.func @transform_1(%arg0: i32) -> (i32, i32) {
    %c0_i32 = arith.constant 0 : i32
    %c0_i32_0 = arith.constant 0 : i32
    %c0_i32_1 = arith.constant 0 : i32
    return %c0_i32, %c0_i32_0 : i32, i32
  }
  func.func @transform_2(%arg0: i32) -> (i32, i32) {
    %c0_i32 = arith.constant 0 : i32
    %c0_i32_0 = arith.constant 0 : i32
    %c0_i32_1 = arith.constant 0 : i32
    return %c0_i32, %c0_i32_0 : i32, i32
  }
  func.func @transform_3(%arg0: i32) -> (i32, i32) {
    %c0_i32 = arith.constant 0 : i32
    %c0_i32_0 = arith.constant 0 : i32
    %c0_i32_1 = arith.constant 0 : i32
    return %c0_i32, %c0_i32_0 : i32, i32
  }
  func.func @transform_4(%arg0: i32) -> (i32, i32) {
    %c0_i32 = arith.constant 0 : i32
    %c0_i32_0 = arith.constant 0 : i32
    %c0_i32_1 = arith.constant 0 : i32
    return %c0_i32, %c0_i32_0 : i32, i32
  }
  func.func @transform_5(%arg0: i32) -> (i32, i32) {
    %c0_i32 = arith.constant 0 : i32
    %c0_i32_0 = arith.constant 0 : i32
    %c0_i32_1 = arith.constant 0 : i32
    return %c0_i32, %c0_i32_0 : i32, i32
  }
  func.func @transform_6(%arg0: i32) -> (i32, i32) {
    %c0_i32 = arith.constant 0 : i32
    %c0_i32_0 = arith.constant 0 : i32
    %c0_i32_1 = arith.constant 0 : i32
    return %c0_i32, %c0_i32_0 : i32, i32
  }
  func.func @transform_7(%arg0: i32) -> (i32, i32) {
    %c0_i32 = arith.constant 0 : i32
    %c0_i32_0 = arith.constant 0 : i32
    return %arg0, %c0_i32 : i32, i32
  }
}

</mosaic_0001>

<llo_original>
// kernel: policy_network_forward.1
$region0: #{policy_network_forward.1}
  #allocation0 [shape = 'u32[]', space=smem, size = 0x4, offset = 0x4, fixed_abs, tag = 'smem constant byte address 0x4 - core index']
  #allocation1 [shape = 'u32[72,128]{1,0:T(1,128)}', space=vmem, size = 0x9000, scoped, tag = 'internal scratch']
  %s0 = inlined_call_operand.hbm [shape: f32[8,16], index: 0, kind: input, shape index: {}]
  %s1 = inlined_call_operand.hbm [shape: bf16[16,128], index: 1, kind: input, shape index: {}]
  %s2 = inlined_call_operand.vmem [shape: f32[1,128], index: 2, kind: input, shape index: {}]
  %s3 = inlined_call_operand.hbm [shape: bf16[128,128], index: 3, kind: input, shape index: {}]
  %s4 = inlined_call_operand.vmem [shape: f32[1,128], index: 4, kind: input, shape index: {}]
  %s5 = inlined_call_operand.hbm [shape: bf16[128,128], index: 5, kind: input, shape index: {}]
  %s6 = inlined_call_operand.vmem [shape: f32[1,128], index: 6, kind: input, shape index: {}]
  %s7 = inlined_call_operand.vmem [shape: f32[8,4], index: 7, kind: output, shape index: {}]
  %s8 = sld [smem:[#allocation0]]
  $region54: #{policy_network_forward.1} parent=0
    _
  %s10 = ssub.s32 1, %s8
  %s11 = scalar_select 0, %s10, %s8
  $region1: #{policy_network_forward.1} parent=0
    #allocation2 [shape = 'u8[4096]{0}', space=vmem, size = 0x1000, scoped, tag = 'input window, operand 0, single buffered']
    #allocation3 [shape = 's32[1]{0}', space=sflag, size = 0x4, scoped, tag = 'scoped memory for policy_network_forward.1']
    #allocation4 [shape = 'u8[4096]{0}', space=vmem, size = 0x1000, scoped, tag = 'input window, operand 1, single buffered']
    #allocation5 [shape = 's32[1]{0}', space=sflag, size = 0x4, scoped, tag = 'scoped memory for policy_network_forward.1']
    #allocation6 [shape = 'u8[32768]{0}', space=vmem, size = 0x8000, scoped, tag = 'input window, operand 3, single buffered']
    #allocation7 [shape = 'u8[32768]{0}', space=vmem, size = 0x8000, scoped, tag = 'input window, operand 5, single buffered']
    #allocation8 [shape = 's32[1]{0}', space=sflag, size = 0x4, scoped, tag = 'scoped memory for policy_network_forward.1']
    %12 = vsyncpa [#allocation3], 0
    %13 = vsyncpa [#allocation5], 0
    %14 = vsyncpa [#allocation8], 0
    // Predicated region
    $region2: #{policy_network_forward.1} parent=1 // pred_check
      _
    $region3: #{policy_network_forward.1} parent=1 // pred_check_branch
      %16 = sbr.rel (0) target = $region5
    $region4: #{policy_network_forward.1} parent=1 // pred_region
      %18 = vsyncadd [#allocation3], 0
      %s20 = sshll.u32 %s0, 4
      %s21 = int_to_ptr.hbm [resolvable:$true] %s20
      %s22 = sshll.u32 [#allocation2], 4
      %s23 = int_to_ptr.vmem [resolvable:$true] %s22
      %25 = dma.hbm_to_vmem [thread:$0]  %s21, 128, %s23, [#allocation3]
    $region5: #{policy_network_forward.1} parent=1 // pred_fallthru
      _
    // Predicated region
    $region6: #{policy_network_forward.1} parent=1 // pred_check
      _
    $region7: #{policy_network_forward.1} parent=1 // pred_check_branch
      %27 = sbr.rel (0) target = $region9
    $region8: #{policy_network_forward.1} parent=1 // pred_region
      %29 = vsyncadd [#allocation5], 0
      %s30 = sshll.u32 %s1, 4
      %s31 = int_to_ptr.hbm [resolvable:$true] %s30
      %s32 = sshll.u32 [#allocation4], 4
      %s33 = int_to_ptr.vmem [resolvable:$true] %s32
      %38 = dma.hbm_to_vmem [thread:$0]  %s31, 128, %s33, [#allocation5], 64, 64, 4
    $region9: #{policy_network_forward.1} parent=1 // pred_fallthru
      _
    // Predicated region
    $region10: #{policy_network_forward.1} parent=1 // pred_check
      _
    $region11: #{policy_network_forward.1} parent=1 // pred_check_branch
      %40 = sbr.rel (0) target = $region13
    $region12: #{policy_network_forward.1} parent=1 // pred_region
      _
    $region13: #{policy_network_forward.1} parent=1 // pred_fallthru
      _
    // Predicated region
    $region14: #{policy_network_forward.1} parent=1 // pred_check
      _
    $region15: #{policy_network_forward.1} parent=1 // pred_check_branch
      %42 = sbr.rel (0) target = $region17
    $region16: #{policy_network_forward.1} parent=1 // pred_region
      %44 = vsyncadd [#allocation5], 0
      %s45 = sshll.u32 %s3, 4
      %s46 = int_to_ptr.hbm [resolvable:$true] %s45
      %s47 = sshll.u32 [#allocation6], 4
      %s48 = int_to_ptr.vmem [resolvable:$true] %s47
      %53 = dma.hbm_to_vmem [thread:$0]  %s46, 1024, %s48, [#allocation5], 64, 64, 4
    $region17: #{policy_network_forward.1} parent=1 // pred_fallthru
      _
    // Predicated region
    $region18: #{policy_network_forward.1} parent=1 // pred_check
      _
    $region19: #{policy_network_forward.1} parent=1 // pred_check_branch
      %55 = sbr.rel (0) target = $region21
    $region20: #{policy_network_forward.1} parent=1 // pred_region
      _
    $region21: #{policy_network_forward.1} parent=1 // pred_fallthru
      _
    // Predicated region
    $region22: #{policy_network_forward.1} parent=1 // pred_check
      _
    $region23: #{policy_network_forward.1} parent=1 // pred_check_branch
      %57 = sbr.rel (0) target = $region25
    $region24: #{policy_network_forward.1} parent=1 // pred_region
      %59 = vsyncadd [#allocation8], 0
      %s60 = sshll.u32 %s5, 4
      %s61 = int_to_ptr.hbm [resolvable:$true] %s60
      %s62 = sshll.u32 [#allocation7], 4
      %s63 = int_to_ptr.vmem [resolvable:$true] %s62
      %68 = dma.hbm_to_vmem [thread:$0]  %s61, 1024, %s63, [#allocation8], 64, 64, 4
    $region25: #{policy_network_forward.1} parent=1 // pred_fallthru
      _
    // Predicated region
    $region26: #{policy_network_forward.1} parent=1 // pred_check
      _
    $region27: #{policy_network_forward.1} parent=1 // pred_check_branch
      %70 = sbr.rel (0) target = $region29
    $region28: #{policy_network_forward.1} parent=1 // pred_region
      _
    $region29: #{policy_network_forward.1} parent=1 // pred_fallthru
      _
    // Predicated region
    $region30: #{policy_network_forward.1} parent=1 // pred_check
      _
    $region31: #{policy_network_forward.1} parent=1 // pred_check_branch
      %72 = sbr.rel (0) target = $region33
    $region32: #{policy_network_forward.1} parent=1 // pred_region
      %74 = dma.done [#allocation3], 128
    $region33: #{policy_network_forward.1} parent=1 // pred_fallthru
      _
    // Predicated region
    $region34: #{policy_network_forward.1} parent=1 // pred_check
      _
    $region35: #{policy_network_forward.1} parent=1 // pred_check_branch
      %76 = sbr.rel (0) target = $region37
    $region36: #{policy_network_forward.1} parent=1 // pred_region
      %78 = dma.done [#allocation5], 128
    $region37: #{policy_network_forward.1} parent=1 // pred_fallthru
      _
    // Predicated region
    $region38: #{policy_network_forward.1} parent=1 // pred_check
      _
    $region39: #{policy_network_forward.1} parent=1 // pred_check_branch
      %80 = sbr.rel (0) target = $region41
    $region40: #{policy_network_forward.1} parent=1 // pred_region
      %82 = dma.done [#allocation5], 1024
    $region41: #{policy_network_forward.1} parent=1 // pred_fallthru
      _
    // Predicated region
    $region42: #{policy_network_forward.1} parent=1 // pred_check
      _
    $region43: #{policy_network_forward.1} parent=1 // pred_check_branch
      %84 = sbr.rel (0) target = $region45
    $region44: #{policy_network_forward.1} parent=1 // pred_region
      %86 = dma.done [#allocation8], 1024
    $region45: #{policy_network_forward.1} parent=1 // pred_fallthru
      _
    %v88 = vld [vmem:[#allocation2] sm:$0xff]
    %v89 = vpack.c.bf16 %v88, %v88
    %v90 = vld [vmem:[#allocation4] sm:$0xf]
    %v91 = vld [vmem:[#allocation4 + $0x4] sm:$0xf]
    %v92 = vld [vmem:[%s2] sm:$0x1]
    %v94 = vperm.slane %v92, 0
    %v98 = vunpack.c.l.b16 %v90
    %v99 = vunpack.c.l.b16 %v91
    %v100 = vpack.c.b16 %v99, %v98
    %vm102 = vcmask 130048
    %v104 = vsel %vm102, %v89, 0
    %106 = vmatpush.bf16.msra.mxu0 0
    %107 = vmatpush.bf16.msra.mxu0 0
    %108 = vmatpush.bf16.msra.mxu0 0
    %109 = vmatpush.bf16.msra.mxu0 0
    %110 = vmatpush.bf16.msra.mxu0 0
    %111 = vmatpush.bf16.msra.mxu0 0
    %112 = vmatpush.bf16.msra.mxu0 0
    %113 = vmatpush.bf16.msra.mxu0 %v100
    %114 = vmatmul.bf16.gmra.mxu0 %v104
    %v115 = vpop.f32.mrf.mxu0
    %v116 = vadd.f32 %v94, %v115
    %v117 = vpop.f32.mrf.mxu0
    %118 = vdwg.mxu0
    %v119 = vmax.f32 %v116, 0.0
    %v120 = vpack.c.bf16 %v119, %v119
    %v121 = vld [vmem:[#allocation6] sm:$0xf]
    %v122 = vld [vmem:[#allocation6 + $0x4] sm:$0xf]
    %v123 = vld [vmem:[#allocation6 + $0x8] sm:$0xf]
    %v124 = vld [vmem:[#allocation6 + $0xc] sm:$0xf]
    %v125 = vld [vmem:[#allocation6 + $0x10] sm:$0xf]
    %v126 = vld [vmem:[#allocation6 + $0x14] sm:$0xf]
    %v127 = vld [vmem:[#allocation6 + $0x18] sm:$0xf]
    %v128 = vld [vmem:[#allocation6 + $0x1c] sm:$0xf]
    %v129 = vld [vmem:[#allocation6 + $0x20] sm:$0xf]
    %v130 = vld [vmem:[#allocation6 + $0x24] sm:$0xf]
    %v131 = vld [vmem:[#allocation6 + $0x28] sm:$0xf]
    %v132 = vld [vmem:[#allocation6 + $0x2c] sm:$0xf]
    %v133 = vld [vmem:[#allocation6 + $0x30] sm:$0xf]
    %v134 = vld [vmem:[#allocation6 + $0x34] sm:$0xf]
    %v135 = vld [vmem:[#allocation6 + $0x38] sm:$0xf]
    %v136 = vld [vmem:[#allocation6 + $0x3c] sm:$0xf]
    %v137 = vld [vmem:[%s4] sm:$0x1]
    %v139 = vperm.slane %v137, 0
    %v157 = vunpack.c.l.b16 %v121
    %v158 = vunpack.c.l.b16 %v122
    %v159 = vunpack.c.l.b16 %v123
    %v160 = vunpack.c.l.b16 %v124
    %v161 = vunpack.c.l.b16 %v125
    %v162 = vunpack.c.l.b16 %v126
    %v163 = vunpack.c.l.b16 %v127
    %v164 = vunpack.c.l.b16 %v128
    %v165 = vunpack.c.l.b16 %v129
    %v166 = vunpack.c.l.b16 %v130
    %v167 = vunpack.c.l.b16 %v131
    %v168 = vunpack.c.l.b16 %v132
    %v169 = vunpack.c.l.b16 %v133
    %v170 = vunpack.c.l.b16 %v134
    %v171 = vunpack.c.l.b16 %v135
    %v172 = vunpack.c.l.b16 %v136
    %v173 = vpack.c.b16 %v158, %v157
    %v174 = vpack.c.b16 %v160, %v159
    %v175 = vpack.c.b16 %v162, %v161
    %v176 = vpack.c.b16 %v164, %v163
    %v177 = vpack.c.b16 %v166, %v165
    %v178 = vpack.c.b16 %v168, %v167
    %v179 = vpack.c.b16 %v170, %v169
    %v180 = vpack.c.b16 %v172, %v171
    %189 = vmatpush.bf16.msra.mxu0 %v180
    %190 = vmatpush.bf16.msra.mxu0 %v179
    %191 = vmatpush.bf16.msra.mxu0 %v178
    %192 = vmatpush.bf16.msra.mxu0 %v177
    %193 = vmatpush.bf16.msra.mxu0 %v176
    %194 = vmatpush.bf16.msra.mxu0 %v175
    %195 = vmatpush.bf16.msra.mxu0 %v174
    %196 = vmatpush.bf16.msra.mxu0 %v173
    %197 = vmatmul.bf16.gmra.mxu0 %v120
    %v198 = vpop.f32.mrf.mxu0
    %v199 = vadd.f32 %v139, %v198
    %v200 = vpop.f32.mrf.mxu0
    %201 = vdwg.mxu0
    %v202 = vmax.f32 %v199, 0.0
    %v203 = vpack.c.bf16 %v202, %v202
    %v204 = vld [vmem:[#allocation7] sm:$0xf]
    %v205 = vld [vmem:[#allocation7 + $0x4] sm:$0xf]
    %v206 = vld [vmem:[#allocation7 + $0x8] sm:$0xf]
    %v207 = vld [vmem:[#allocation7 + $0xc] sm:$0xf]
    %v208 = vld [vmem:[#allocation7 + $0x10] sm:$0xf]
    %v209 = vld [vmem:[#allocation7 + $0x14] sm:$0xf]
    %v210 = vld [vmem:[#allocation7 + $0x18] sm:$0xf]
    %v211 = vld [vmem:[#allocation7 + $0x1c] sm:$0xf]
    %v212 = vld [vmem:[#allocation7 + $0x20] sm:$0xf]
    %v213 = vld [vmem:[#allocation7 + $0x24] sm:$0xf]
    %v214 = vld [vmem:[#allocation7 + $0x28] sm:$0xf]
    %v215 = vld [vmem:[#allocation7 + $0x2c] sm:$0xf]
    %v216 = vld [vmem:[#allocation7 + $0x30] sm:$0xf]
    %v217 = vld [vmem:[#allocation7 + $0x34] sm:$0xf]
    %v218 = vld [vmem:[#allocation7 + $0x38] sm:$0xf]
    %v219 = vld [vmem:[#allocation7 + $0x3c] sm:$0xf]
    %v220 = vld [vmem:[%s6] sm:$0x1]
    %v222 = vperm.slane %v220, 0
    %v240 = vunpack.c.l.b16 %v204
    %v241 = vunpack.c.l.b16 %v205
    %v242 = vunpack.c.l.b16 %v206
    %v243 = vunpack.c.l.b16 %v207
    %v244 = vunpack.c.l.b16 %v208
    %v245 = vunpack.c.l.b16 %v209
    %v246 = vunpack.c.l.b16 %v210
    %v247 = vunpack.c.l.b16 %v211
    %v248 = vunpack.c.l.b16 %v212
    %v249 = vunpack.c.l.b16 %v213
    %v250 = vunpack.c.l.b16 %v214
    %v251 = vunpack.c.l.b16 %v215
    %v252 = vunpack.c.l.b16 %v216
    %v253 = vunpack.c.l.b16 %v217
    %v254 = vunpack.c.l.b16 %v218
    %v255 = vunpack.c.l.b16 %v219
    %v256 = vpack.c.b16 %v241, %v240
    %v257 = vpack.c.b16 %v243, %v242
    %v258 = vpack.c.b16 %v245, %v244
    %v259 = vpack.c.b16 %v247, %v246
    %v260 = vpack.c.b16 %v249, %v248
    %v261 = vpack.c.b16 %v251, %v250
    %v262 = vpack.c.b16 %v253, %v252
    %v263 = vpack.c.b16 %v255, %v254
    %272 = vmatpush.bf16.msra.mxu0 %v263
    %273 = vmatpush.bf16.msra.mxu0 %v262
    %274 = vmatpush.bf16.msra.mxu0 %v261
    %275 = vmatpush.bf16.msra.mxu0 %v260
    %276 = vmatpush.bf16.msra.mxu0 %v259
    %277 = vmatpush.bf16.msra.mxu0 %v258
    %278 = vmatpush.bf16.msra.mxu0 %v257
    %279 = vmatpush.bf16.msra.mxu0 %v256
    %280 = vmatmul.bf16.gmra.mxu0 %v203
    %v281 = vpop.f32.mrf.mxu0
    %v282 = vadd.f32 %v222, %v281
    %v283 = vpop.f32.mrf.mxu0
    %284 = vdwg.mxu0
    %285 = vmax.xlane.f32.xlu0 %v282
    %v286 = vpop.xlane.xlu0 %285
    %v287 = vsub.f32 %v282, %v286
    %v288 = vmul.f32 %v287, 1.442695
    %v289 = vpow.pop %v288
    %290 = vadd.xlane.f32.xlu0 %v289
    %v291 = vpop.xlane.xlu0 %290
    %v292 = vrcp.pop %v291
    %v293 = vmul.f32 %v291, %v292
    %v294 = vsub.f32 1.0, %v293
    %v295 = vmul.f32 %v292, %v294
    %v296 = vadd.f32 %v292, %v295
    %vm297 = vweird.f32 %v291
    %vm298 = vweird.f32 %v292
    %vm299 = vmor %vm297, %vm298
    %v300 = vsel %vm299, %v292, %v296
    %v301 = vand.u32 2147483647, %v291
    %vm302 = vcmp.eq.f32.partialorder %v301, 8.507059e+37
    %v303 = vand.u32 %v291, 2147483648
    %v304 = vor.u32 1.1754944e-38, %v303
    %v305 = vsel %vm302, %v304, %v300
    %v306 = vmul.f32 %v289, %v305
    %vm307 = vcmask 31744
    %308 = vst.msk [vmem:[%s7] sm:$0xff] %vm307, %v306
    // Predicated region
    $region46: #{policy_network_forward.1} parent=1 // pred_check
      _
    $region47: #{policy_network_forward.1} parent=1 // pred_check_branch
      %310 = sbr.rel (0) target = $region49
    $region48: #{policy_network_forward.1} parent=1 // pred_region
      _
    $region49: #{policy_network_forward.1} parent=1 // pred_fallthru
      _
    // Predicated region
    $region50: #{policy_network_forward.1} parent=1 // pred_check
      _
    $region51: #{policy_network_forward.1} parent=1 // pred_check_branch
      %312 = sbr.rel (0) target = $region53
    $region52: #{policy_network_forward.1} parent=1 // pred_region
      _
    $region53: #{policy_network_forward.1} parent=1 // pred_fallthru
      _
    %313 = vsyncpa [#allocation3], 1
    %314 = vsyncpa [#allocation5], 1
    %315 = vsyncpa [#allocation8], 1

</llo_original>
